<compile_context>
chip_gen: v5e
topology: v5e:2x2
jax: 0.10.0
libtpu: 0.0.40
codegen_flags: <defaults>
</compile_context>

<pallas_src>
import math
import jax
import jax.numpy as jnp
from jax.experimental import pallas as pl
from jax.experimental.pallas import tpu as pltpu

# ---------------- model hyper-params (small, synthetic) ----------------
B = 2          # batch
S = 8          # sequence length
D = 32         # d_model
H = 4          # num heads
DK = D // H    # head dim
DFF = D << 2   # 128
LN_EPS = 1e-5


def encoder_layer_kernel(
    x_ref, mask_ref,
    wqkv_ref, bqkv_ref, wo_ref, bo_ref,
    ln1_g_ref, ln1_b_ref,
    w1_ref, b1_ref, w2_ref, b2_ref,
    ln2_g_ref, ln2_b_ref,
    out_ref,
):
    x = x_ref[...]                                   # (B, S, D) f32
    x_flat = x.reshape(B * S, D)                     # leading-dim merge only (cheap)

    # ---- fused QKV projection: one MXU matmul, bf16 operands, f32 accumulation ----
    qkv = jnp.dot(x_flat.astype(jnp.bfloat16), wqkv_ref[...],
                  preferred_element_type=jnp.float32) + bqkv_ref[...]    # (B*S, 3D) f32
    qkv = qkv.reshape(B, S, 3 * D)                   # leading-dim split only

    # Additive mask bias computed once and shared by all heads (1 = keep, 0 -> -1e9).
    bias = jnp.where(mask_ref[...] == 0.0, jnp.float32(-1e9), jnp.float32(0.0))  # (B,S,S)

    # ---- multi-head attention: heads statically unrolled, batch handled by einsum ----
    attn_flat = jnp.zeros((B * S, D), jnp.float32)
    for hh in range(H):
        lo = hh * DK
        q_h = qkv[:, :, lo:lo + DK]                  # (B, S, DK), already scaled by 1/sqrt(dk)
        k_h = qkv[:, :, D + lo:D + lo + DK]          # (B, S, DK)
        v_h = qkv[:, :, 2 * D + lo:2 * D + lo + DK]  # (B, S, DK)

        # Contract on the last dim of both operands -> no explicit K transpose.
        s = jnp.einsum('bqd,bkd->bqk',
                       q_h.astype(jnp.bfloat16), k_h.astype(jnp.bfloat16),
                       preferred_element_type=jnp.float32) + bias        # (B, S, S) f32

        m = jnp.max(s, axis=-1, keepdims=True)
        p = jnp.exp(s - m)
        p = p * pl.reciprocal(jnp.sum(p, axis=-1, keepdims=True), approx=True)

        ctx = jnp.einsum('bqk,bkd->bqd',
                         p.astype(jnp.bfloat16), v_h.astype(jnp.bfloat16),
                         preferred_element_type=jnp.float32)             # (B, S, DK) f32

        # Accumulate the output projection per head (avoids the concat lane shuffle):
        #   attn += ctx_h @ Wo[h*DK:(h+1)*DK, :]
        attn_flat = attn_flat + jnp.dot(
            ctx.reshape(B * S, DK).astype(jnp.bfloat16), wo_ref[hh],
            preferred_element_type=jnp.float32)

    attn_flat = attn_flat + bo_ref[...]

    # ---- residual + LayerNorm 1 (f32) ----
    x1 = x_flat + attn_flat
    mu1 = jnp.mean(x1, axis=-1, keepdims=True)
    var1 = jnp.mean((x1 - mu1) ** 2, axis=-1, keepdims=True)
    x1n = (x1 - mu1) * jax.lax.rsqrt(var1 + LN_EPS) * ln1_g_ref[...] + ln1_b_ref[...]

    # ---- FFN (bf16 matmuls, f32 accumulation) + residual + LayerNorm 2 ----
    h1 = jnp.dot(x1n.astype(jnp.bfloat16), w1_ref[...],
                 preferred_element_type=jnp.float32) + b1_ref[...]
    h1 = jnp.maximum(h1, 0.0)
    h2 = jnp.dot(h1.astype(jnp.bfloat16), w2_ref[...],
                 preferred_element_type=jnp.float32) + b2_ref[...]

    x2 = x1n + h2
    mu2 = jnp.mean(x2, axis=-1, keepdims=True)
    var2 = jnp.mean((x2 - mu2) ** 2, axis=-1, keepdims=True)
    out = (x2 - mu2) * jax.lax.rsqrt(var2 + LN_EPS) * ln2_g_ref[...] + ln2_b_ref[...]

    out_ref[...] = out.reshape(B, S, D).astype(out_ref.dtype)


def transformer_encoder_layer(x, mask, kernel_params):
    """x: (B, S, D) f32, mask: (B, S, S) f32 (1=keep, 0=mask). Single kernel invocation."""
    n_inputs = 2 + len(kernel_params)
    vmem = lambda: pl.BlockSpec(memory_space=pltpu.MemorySpace.VMEM)
    return pl.pallas_call(
        encoder_layer_kernel,
        out_shape=jax.ShapeDtypeStruct((B, S, D), jnp.float32),
        in_specs=[vmem() for _ in range(n_inputs)],
        out_specs=vmem(),
    )(x, mask, *kernel_params)


def prepare_kernel_params(params):
    """Host-side param prep: fuse Wq|Wk|Wv, fold 1/sqrt(dk) into the Q columns,
    split Wo per head, and cast matmul weights to bf16 (biases / LN params stay f32)."""
    (wq, bq, wk, bk, wv, bv, wo, bo,
     g1, beta1, w1, bb1, w2, bb2, g2, beta2) = params
    inv_sqrt_dk = 1.0 / math.sqrt(DK)
    wqkv = jnp.concatenate([wq * inv_sqrt_dk, wk, wv], axis=1).astype(jnp.bfloat16)  # (D, 3D)
    bqkv = jnp.concatenate([bq * inv_sqrt_dk, bk, bv], axis=1)                        # (1, 3D)
    wo_heads = wo.reshape(H, DK, D).astype(jnp.bfloat16)                              # (H, DK, D)
    return (wqkv, bqkv, wo_heads, bo,
            g1, beta1,
            w1.astype(jnp.bfloat16), bb1,
            w2.astype(jnp.bfloat16), bb2,
            g2, beta2)


# ---------------- pure-JAX f32 reference (mirrors the PyTorch forward) ----------------
def reference(x, mask, params):
    (wq, bq, wk, bk, wv, bv, wo, bo,
     g1, b1_, w1, bb1, w2, bb2, g2, b2_) = params

    def ln(z, g, b):
        mu = jnp.mean(z, axis=-1, keepdims=True)
        var = jnp.mean((z - mu) ** 2, axis=-1, keepdims=True)
        return (z - mu) / jnp.sqrt(var + LN_EPS) * g + b

    q = x @ wq + bq
    k = x @ wk + bk
    v = x @ wv + bv
    rs = lambda t: t.reshape(B, S, H, DK).transpose(0, 2, 1, 3)
    qh, kh, vh = rs(q), rs(k), rs(v)
    scores = jnp.einsum("bhqd,bhkd->bhqk", qh, kh) / math.sqrt(DK)
    scores = jnp.where(mask[:, None, :, :] == 0.0, -1e9, scores)
    p = jax.nn.softmax(scores, axis=-1)
    o = jnp.einsum("bhqk,bhkd->bhqd", p, vh).transpose(0, 2, 1, 3).reshape(B, S, D)
    o = o @ wo + bo
    x1 = ln(x + o, g1, b1_)
    h = jnp.maximum(x1 @ w1 + bb1, 0.0)
    h = h @ w2 + bb2
    return ln(x1 + h, g2, b2_)


def make_params(key):
    """Deterministic synthetic parameters. PyTorch Linear weights are (out, in) and
    compute x @ W.T + b; we store the pre-transposed (in, out) form."""
    ks = jax.random.split(key, 12)

    def lin(kk, fan_in, fan_out):
        bound = 1.0 / math.sqrt(fan_in)
        w = jax.random.uniform(kk, (fan_in, fan_out), jnp.float32, -bound, bound)
        b = jax.random.uniform(jax.random.fold_in(kk, 1), (1, fan_out),
                               jnp.float32, -bound, bound)
        return w, b

    wq, bq = lin(ks[0], D, D)
    wk, bk = lin(ks[1], D, D)
    wv, bv = lin(ks[2], D, D)
    wo, bo = lin(ks[3], D, D)
    w1, bb1 = lin(ks[4], D, DFF)
    w2, bb2 = lin(ks[5], DFF, D)
    g1 = jnp.ones((1, D), jnp.float32)
    b1_ = jnp.zeros((1, D), jnp.float32)
    g2 = jnp.ones((1, D), jnp.float32)
    b2_ = jnp.zeros((1, D), jnp.float32)
    return (wq, bq, wk, bk, wv, bv, wo, bo, g1, b1_, w1, bb1, w2, bb2, g2, b2_)


if __name__ == "__main__":
    key = jax.random.PRNGKey(0)
    kx, kp, _ = jax.random.split(key, 3)

    x = jax.random.normal(kx, (B, S, D), jnp.float32)

    # Padding-style mask: batch b attends only to the first `lens[b]` keys.
    lens = jnp.array([S, S - 3], dtype=jnp.int32)
    key_valid = (jnp.arange(S)[None, :] < lens[:, None]).astype(jnp.float32)  # (B, S)
    mask = jnp.broadcast_to(key_valid[:, None, :], (B, S, S)).astype(jnp.float32)

    params = make_params(kp)
    kparams = prepare_kernel_params(params)

    out = transformer_encoder_layer(x, mask, kparams)
    out = jax.block_until_ready(out)

    ref = reference(x, mask, params)
    assert out.shape == (B, S, D)
    # Tolerance accounts for bf16 MXU operands (f32 accumulation) vs. the f32 reference.
    assert jnp.allclose(out, ref, atol=5e-2, rtol=5e-2), \
        f"max abs err {jnp.max(jnp.abs(out - ref))}"

    print("KERNEL_OK")
</pallas_src>

<mosaic_0001>
module attributes {stable_mosaic.version = 11 : i64} {
  func.func @encoder_layer_kernel(%arg0: memref<2x8x32xf32, #tpu.memory_space<vmem>>, %arg1: memref<2x8x8xf32, #tpu.memory_space<vmem>>, %arg2: memref<32x96xbf16, #tpu.memory_space<vmem>>, %arg3: memref<1x96xf32, #tpu.memory_space<vmem>>, %arg4: memref<4x8x32xbf16, #tpu.memory_space<vmem>>, %arg5: memref<1x32xf32, #tpu.memory_space<vmem>>, %arg6: memref<1x32xf32, #tpu.memory_space<vmem>>, %arg7: memref<1x32xf32, #tpu.memory_space<vmem>>, %arg8: memref<32x128xbf16, #tpu.memory_space<vmem>>, %arg9: memref<1x128xf32, #tpu.memory_space<vmem>>, %arg10: memref<128x32xbf16, #tpu.memory_space<vmem>>, %arg11: memref<1x32xf32, #tpu.memory_space<vmem>>, %arg12: memref<1x32xf32, #tpu.memory_space<vmem>>, %arg13: memref<1x32xf32, #tpu.memory_space<vmem>>, %arg14: memref<2x8x32xf32, #tpu.memory_space<vmem>>) attributes {dimension_semantics = [], scalar_prefetch = 0 : i64, scratch_operands = 0 : i64, tpu.core_type = #tpu.core_type<tc>} {
    %c0 = arith.constant 0 : index
    %c0_0 = arith.constant 0 : index
    %c0_1 = arith.constant 0 : index
    %0 = vector.load %arg0[%c0, %c0_0, %c0_1] : memref<2x8x32xf32, #tpu.memory_space<vmem>>, vector<2x8x32xf32>
    %1 = vector.shape_cast %0 : vector<2x8x32xf32> to vector<16x32xf32>
    %2 = arith.truncf %1 : vector<16x32xf32> to vector<16x32xbf16>
    %c0_2 = arith.constant 0 : index
    %c0_3 = arith.constant 0 : index
    %3 = vector.load %arg2[%c0_2, %c0_3] : memref<32x96xbf16, #tpu.memory_space<vmem>>, vector<32x96xbf16>
    %cst = arith.constant dense<0.000000e+00> : vector<16x96xf32>
    %4 = tpu.matmul %2, %3, %cst {dimension_numbers = #tpu.dot_dimension_numbers<[1], [0], [0], [1], [0, 0, 1, 1], [], []>} : vector<16x32xbf16>, vector<32x96xbf16>, vector<16x96xf32> -> vector<16x96xf32>
    %c0_4 = arith.constant 0 : index
    %c0_5 = arith.constant 0 : index
    %5 = vector.load %arg3[%c0_4, %c0_5] : memref<1x96xf32, #tpu.memory_space<vmem>>, vector<1x96xf32>
    %6 = vector.broadcast %5 : vector<1x96xf32> to vector<16x96xf32>
    %7 = arith.addf %4, %6 : vector<16x96xf32>
    %8 = vector.shape_cast %7 : vector<16x96xf32> to vector<2x8x96xf32>
    %c0_6 = arith.constant 0 : index
    %c0_7 = arith.constant 0 : index
    %c0_8 = arith.constant 0 : index
    %9 = vector.load %arg1[%c0_6, %c0_7, %c0_8] : memref<2x8x8xf32, #tpu.memory_space<vmem>>, vector<2x8x8xf32>
    %cst_9 = arith.constant 0.000000e+00 : f32
    %10 = vector.broadcast %cst_9 : f32 to vector<2x8x8xf32>
    %11 = arith.cmpf oeq, %9, %10 : vector<2x8x8xf32>
    %cst_10 = arith.constant -1.000000e+09 : f32
    %cst_11 = arith.constant 0.000000e+00 : f32
    %12 = vector.broadcast %cst_10 : f32 to vector<2x8x8xf32>
    %13 = vector.broadcast %cst_11 : f32 to vector<2x8x8xf32>
    %14 = arith.select %11, %12, %13 : vector<2x8x8xi1>, vector<2x8x8xf32>
    %cst_12 = arith.constant 0.000000e+00 : f32
    %15 = vector.broadcast %cst_12 : f32 to vector<16x32xf32>
    %16 = vector.extract_strided_slice %8 {offsets = [0, 0, 0], sizes = [2, 8, 8], strides = [1, 1, 1]} : vector<2x8x96xf32> to vector<2x8x8xf32>
    %17 = vector.extract_strided_slice %8 {offsets = [0, 0, 32], sizes = [2, 8, 8], strides = [1, 1, 1]} : vector<2x8x96xf32> to vector<2x8x8xf32>
    %18 = vector.extract_strided_slice %8 {offsets = [0, 0, 64], sizes = [2, 8, 8], strides = [1, 1, 1]} : vector<2x8x96xf32> to vector<2x8x8xf32>
    %19 = arith.truncf %16 : vector<2x8x8xf32> to vector<2x8x8xbf16>
    %20 = arith.truncf %17 : vector<2x8x8xf32> to vector<2x8x8xbf16>
    "tpu.trace_start"() <{level = 10 : i32, message = "bqd,bkd->bqk"}> : () -> ()
    %cst_13 = arith.constant dense<0.000000e+00> : vector<2x8x8xf32>
    %21 = tpu.matmul %19, %20, %cst_13 {dimension_numbers = #tpu.dot_dimension_numbers<[2], [2], [1], [1], [0, 0, 0, 1, 1, 1], [0], [0]>} : vector<2x8x8xbf16>, vector<2x8x8xbf16>, vector<2x8x8xf32> -> vector<2x8x8xf32>
    "tpu.trace_stop"() : () -> ()
    %22 = arith.addf %21, %14 : vector<2x8x8xf32>
    %cst_14 = arith.constant dense<0xFF800000> : vector<2x8xf32>
    %23 = vector.multi_reduction <maximumf>, %22, %cst_14 [2] : vector<2x8x8xf32> to vector<2x8xf32>
    %24 = vector.shape_cast %23 : vector<2x8xf32> to vector<2x8x1xf32>
    %25 = vector.broadcast %24 : vector<2x8x1xf32> to vector<2x8x8xf32>
    %26 = arith.subf %22, %25 : vector<2x8x8xf32>
    %27 = math.exp %26 : vector<2x8x8xf32>
    %cst_15 = arith.constant dense<0.000000e+00> : vector<2x8xf32>
    %28 = vector.multi_reduction <add>, %27, %cst_15 [2] : vector<2x8x8xf32> to vector<2x8xf32>
    %29 = vector.shape_cast %28 : vector<2x8xf32> to vector<2x8x1xf32>
    %30 = tpu.reciprocal %29 {approx = true} : vector<2x8x1xf32> -> vector<2x8x1xf32>
    %31 = vector.broadcast %30 : vector<2x8x1xf32> to vector<2x8x8xf32>
    %32 = arith.mulf %27, %31 : vector<2x8x8xf32>
    %33 = arith.truncf %32 : vector<2x8x8xf32> to vector<2x8x8xbf16>
    %34 = arith.truncf %18 : vector<2x8x8xf32> to vector<2x8x8xbf16>
    "tpu.trace_start"() <{level = 10 : i32, message = "bqk,bkd->bqd"}> : () -> ()
    %cst_16 = arith.constant dense<0.000000e+00> : vector<2x8x8xf32>
    %35 = tpu.matmul %33, %34, %cst_16 {dimension_numbers = #tpu.dot_dimension_numbers<[2], [1], [1], [2], [0, 0, 0, 1, 1, 2], [0], [0]>} : vector<2x8x8xbf16>, vector<2x8x8xbf16>, vector<2x8x8xf32> -> vector<2x8x8xf32>
    "tpu.trace_stop"() : () -> ()
    %36 = vector.shape_cast %35 : vector<2x8x8xf32> to vector<16x8xf32>
    %37 = arith.truncf %36 : vector<16x8xf32> to vector<16x8xbf16>
    %c0_17 = arith.constant 0 : index
    %c0_18 = arith.constant 0 : index
    %c0_19 = arith.constant 0 : index
    %38 = vector.load %arg4[%c0_17, %c0_18, %c0_19] : memref<4x8x32xbf16, #tpu.memory_space<vmem>>, vector<1x8x32xbf16>
    %39 = vector.shape_cast %38 : vector<1x8x32xbf16> to vector<8x32xbf16>
    %cst_20 = arith.constant dense<0.000000e+00> : vector<16x32xf32>
    %40 = tpu.matmul %37, %39, %cst_20 {dimension_numbers = #tpu.dot_dimension_numbers<[1], [0], [0], [1], [0, 0, 1, 1], [], []>} : vector<16x8xbf16>, vector<8x32xbf16>, vector<16x32xf32> -> vector<16x32xf32>
    %41 = arith.addf %15, %40 : vector<16x32xf32>
    %42 = vector.extract_strided_slice %8 {offsets = [0, 0, 8], sizes = [2, 8, 8], strides = [1, 1, 1]} : vector<2x8x96xf32> to vector<2x8x8xf32>
    %43 = vector.extract_strided_slice %8 {offsets = [0, 0, 40], sizes = [2, 8, 8], strides = [1, 1, 1]} : vector<2x8x96xf32> to vector<2x8x8xf32>
    %44 = vector.extract_strided_slice %8 {offsets = [0, 0, 72], sizes = [2, 8, 8], strides = [1, 1, 1]} : vector<2x8x96xf32> to vector<2x8x8xf32>
    %45 = arith.truncf %42 : vector<2x8x8xf32> to vector<2x8x8xbf16>
    %46 = arith.truncf %43 : vector<2x8x8xf32> to vector<2x8x8xbf16>
    "tpu.trace_start"() <{level = 10 : i32, message = "bqd,bkd->bqk"}> : () -> ()
    %cst_21 = arith.constant dense<0.000000e+00> : vector<2x8x8xf32>
    %47 = tpu.matmul %45, %46, %cst_21 {dimension_numbers = #tpu.dot_dimension_numbers<[2], [2], [1], [1], [0, 0, 0, 1, 1, 1], [0], [0]>} : vector<2x8x8xbf16>, vector<2x8x8xbf16>, vector<2x8x8xf32> -> vector<2x8x8xf32>
    "tpu.trace_stop"() : () -> ()
    %48 = arith.addf %47, %14 : vector<2x8x8xf32>
    %cst_22 = arith.constant dense<0xFF800000> : vector<2x8xf32>
    %49 = vector.multi_reduction <maximumf>, %48, %cst_22 [2] : vector<2x8x8xf32> to vector<2x8xf32>
    %50 = vector.shape_cast %49 : vector<2x8xf32> to vector<2x8x1xf32>
    %51 = vector.broadcast %50 : vector<2x8x1xf32> to vector<2x8x8xf32>
    %52 = arith.subf %48, %51 : vector<2x8x8xf32>
    %53 = math.exp %52 : vector<2x8x8xf32>
    %cst_23 = arith.constant dense<0.000000e+00> : vector<2x8xf32>
    %54 = vector.multi_reduction <add>, %53, %cst_23 [2] : vector<2x8x8xf32> to vector<2x8xf32>
    %55 = vector.shape_cast %54 : vector<2x8xf32> to vector<2x8x1xf32>
    %56 = tpu.reciprocal %55 {approx = true} : vector<2x8x1xf32> -> vector<2x8x1xf32>
    %57 = vector.broadcast %56 : vector<2x8x1xf32> to vector<2x8x8xf32>
    %58 = arith.mulf %53, %57 : vector<2x8x8xf32>
    %59 = arith.truncf %58 : vector<2x8x8xf32> to vector<2x8x8xbf16>
    %60 = arith.truncf %44 : vector<2x8x8xf32> to vector<2x8x8xbf16>
    "tpu.trace_start"() <{level = 10 : i32, message = "bqk,bkd->bqd"}> : () -> ()
    %cst_24 = arith.constant dense<0.000000e+00> : vector<2x8x8xf32>
    %61 = tpu.matmul %59, %60, %cst_24 {dimension_numbers = #tpu.dot_dimension_numbers<[2], [1], [1], [2], [0, 0, 0, 1, 1, 2], [0], [0]>} : vector<2x8x8xbf16>, vector<2x8x8xbf16>, vector<2x8x8xf32> -> vector<2x8x8xf32>
    "tpu.trace_stop"() : () -> ()
    %62 = vector.shape_cast %61 : vector<2x8x8xf32> to vector<16x8xf32>
    %63 = arith.truncf %62 : vector<16x8xf32> to vector<16x8xbf16>
    %c1 = arith.constant 1 : index
    %c0_25 = arith.constant 0 : index
    %c0_26 = arith.constant 0 : index
    %64 = vector.load %arg4[%c1, %c0_25, %c0_26] : memref<4x8x32xbf16, #tpu.memory_space<vmem>>, vector<1x8x32xbf16>
    %65 = vector.shape_cast %64 : vector<1x8x32xbf16> to vector<8x32xbf16>
    %cst_27 = arith.constant dense<0.000000e+00> : vector<16x32xf32>
    %66 = tpu.matmul %63, %65, %cst_27 {dimension_numbers = #tpu.dot_dimension_numbers<[1], [0], [0], [1], [0, 0, 1, 1], [], []>} : vector<16x8xbf16>, vector<8x32xbf16>, vector<16x32xf32> -> vector<16x32xf32>
    %67 = arith.addf %41, %66 : vector<16x32xf32>
    %68 = vector.extract_strided_slice %8 {offsets = [0, 0, 16], sizes = [2, 8, 8], strides = [1, 1, 1]} : vector<2x8x96xf32> to vector<2x8x8xf32>
    %69 = vector.extract_strided_slice %8 {offsets = [0, 0, 48], sizes = [2, 8, 8], strides = [1, 1, 1]} : vector<2x8x96xf32> to vector<2x8x8xf32>
    %70 = vector.extract_strided_slice %8 {offsets = [0, 0, 80], sizes = [2, 8, 8], strides = [1, 1, 1]} : vector<2x8x96xf32> to vector<2x8x8xf32>
    %71 = arith.truncf %68 : vector<2x8x8xf32> to vector<2x8x8xbf16>
    %72 = arith.truncf %69 : vector<2x8x8xf32> to vector<2x8x8xbf16>
    "tpu.trace_start"() <{level = 10 : i32, message = "bqd,bkd->bqk"}> : () -> ()
    %cst_28 = arith.constant dense<0.000000e+00> : vector<2x8x8xf32>
    %73 = tpu.matmul %71, %72, %cst_28 {dimension_numbers = #tpu.dot_dimension_numbers<[2], [2], [1], [1], [0, 0, 0, 1, 1, 1], [0], [0]>} : vector<2x8x8xbf16>, vector<2x8x8xbf16>, vector<2x8x8xf32> -> vector<2x8x8xf32>
    "tpu.trace_stop"() : () -> ()
    %74 = arith.addf %73, %14 : vector<2x8x8xf32>
    %cst_29 = arith.constant dense<0xFF800000> : vector<2x8xf32>
    %75 = vector.multi_reduction <maximumf>, %74, %cst_29 [2] : vector<2x8x8xf32> to vector<2x8xf32>
    %76 = vector.shape_cast %75 : vector<2x8xf32> to vector<2x8x1xf32>
    %77 = vector.broadcast %76 : vector<2x8x1xf32> to vector<2x8x8xf32>
    %78 = arith.subf %74, %77 : vector<2x8x8xf32>
    %79 = math.exp %78 : vector<2x8x8xf32>
    %cst_30 = arith.constant dense<0.000000e+00> : vector<2x8xf32>
    %80 = vector.multi_reduction <add>, %79, %cst_30 [2] : vector<2x8x8xf32> to vector<2x8xf32>
    %81 = vector.shape_cast %80 : vector<2x8xf32> to vector<2x8x1xf32>
    %82 = tpu.reciprocal %81 {approx = true} : vector<2x8x1xf32> -> vector<2x8x1xf32>
    %83 = vector.broadcast %82 : vector<2x8x1xf32> to vector<2x8x8xf32>
    %84 = arith.mulf %79, %83 : vector<2x8x8xf32>
    %85 = arith.truncf %84 : vector<2x8x8xf32> to vector<2x8x8xbf16>
    %86 = arith.truncf %70 : vector<2x8x8xf32> to vector<2x8x8xbf16>
    "tpu.trace_start"() <{level = 10 : i32, message = "bqk,bkd->bqd"}> : () -> ()
    %cst_31 = arith.constant dense<0.000000e+00> : vector<2x8x8xf32>
    %87 = tpu.matmul %85, %86, %cst_31 {dimension_numbers = #tpu.dot_dimension_numbers<[2], [1], [1], [2], [0, 0, 0, 1, 1, 2], [0], [0]>} : vector<2x8x8xbf16>, vector<2x8x8xbf16>, vector<2x8x8xf32> -> vector<2x8x8xf32>
    "tpu.trace_stop"() : () -> ()
    %88 = vector.shape_cast %87 : vector<2x8x8xf32> to vector<16x8xf32>
    %89 = arith.truncf %88 : vector<16x8xf32> to vector<16x8xbf16>
    %c2 = arith.constant 2 : index
    %c0_32 = arith.constant 0 : index
    %c0_33 = arith.constant 0 : index
    %90 = vector.load %arg4[%c2, %c0_32, %c0_33] : memref<4x8x32xbf16, #tpu.memory_space<vmem>>, vector<1x8x32xbf16>
    %91 = vector.shape_cast %90 : vector<1x8x32xbf16> to vector<8x32xbf16>
    %cst_34 = arith.constant dense<0.000000e+00> : vector<16x32xf32>
    %92 = tpu.matmul %89, %91, %cst_34 {dimension_numbers = #tpu.dot_dimension_numbers<[1], [0], [0], [1], [0, 0, 1, 1], [], []>} : vector<16x8xbf16>, vector<8x32xbf16>, vector<16x32xf32> -> vector<16x32xf32>
    %93 = arith.addf %67, %92 : vector<16x32xf32>
    %94 = vector.extract_strided_slice %8 {offsets = [0, 0, 24], sizes = [2, 8, 8], strides = [1, 1, 1]} : vector<2x8x96xf32> to vector<2x8x8xf32>
    %95 = vector.extract_strided_slice %8 {offsets = [0, 0, 56], sizes = [2, 8, 8], strides = [1, 1, 1]} : vector<2x8x96xf32> to vector<2x8x8xf32>
    %96 = vector.extract_strided_slice %8 {offsets = [0, 0, 88], sizes = [2, 8, 8], strides = [1, 1, 1]} : vector<2x8x96xf32> to vector<2x8x8xf32>
    %97 = arith.truncf %94 : vector<2x8x8xf32> to vector<2x8x8xbf16>
    %98 = arith.truncf %95 : vector<2x8x8xf32> to vector<2x8x8xbf16>
    "tpu.trace_start"() <{level = 10 : i32, message = "bqd,bkd->bqk"}> : () -> ()
    %cst_35 = arith.constant dense<0.000000e+00> : vector<2x8x8xf32>
    %99 = tpu.matmul %97, %98, %cst_35 {dimension_numbers = #tpu.dot_dimension_numbers<[2], [2], [1], [1], [0, 0, 0, 1, 1, 1], [0], [0]>} : vector<2x8x8xbf16>, vector<2x8x8xbf16>, vector<2x8x8xf32> -> vector<2x8x8xf32>
    "tpu.trace_stop"() : () -> ()
    %100 = arith.addf %99, %14 : vector<2x8x8xf32>
    %cst_36 = arith.constant dense<0xFF800000> : vector<2x8xf32>
    %101 = vector.multi_reduction <maximumf>, %100, %cst_36 [2] : vector<2x8x8xf32> to vector<2x8xf32>
    %102 = vector.shape_cast %101 : vector<2x8xf32> to vector<2x8x1xf32>
    %103 = vector.broadcast %102 : vector<2x8x1xf32> to vector<2x8x8xf32>
    %104 = arith.subf %100, %103 : vector<2x8x8xf32>
    %105 = math.exp %104 : vector<2x8x8xf32>
    %cst_37 = arith.constant dense<0.000000e+00> : vector<2x8xf32>
    %106 = vector.multi_reduction <add>, %105, %cst_37 [2] : vector<2x8x8xf32> to vector<2x8xf32>
    %107 = vector.shape_cast %106 : vector<2x8xf32> to vector<2x8x1xf32>
    %108 = tpu.reciprocal %107 {approx = true} : vector<2x8x1xf32> -> vector<2x8x1xf32>
    %109 = vector.broadcast %108 : vector<2x8x1xf32> to vector<2x8x8xf32>
    %110 = arith.mulf %105, %109 : vector<2x8x8xf32>
    %111 = arith.truncf %110 : vector<2x8x8xf32> to vector<2x8x8xbf16>
    %112 = arith.truncf %96 : vector<2x8x8xf32> to vector<2x8x8xbf16>
    "tpu.trace_start"() <{level = 10 : i32, message = "bqk,bkd->bqd"}> : () -> ()
    %cst_38 = arith.constant dense<0.000000e+00> : vector<2x8x8xf32>
    %113 = tpu.matmul %111, %112, %cst_38 {dimension_numbers = #tpu.dot_dimension_numbers<[2], [1], [1], [2], [0, 0, 0, 1, 1, 2], [0], [0]>} : vector<2x8x8xbf16>, vector<2x8x8xbf16>, vector<2x8x8xf32> -> vector<2x8x8xf32>
    "tpu.trace_stop"() : () -> ()
    %114 = vector.shape_cast %113 : vector<2x8x8xf32> to vector<16x8xf32>
    %115 = arith.truncf %114 : vector<16x8xf32> to vector<16x8xbf16>
    %c3 = arith.constant 3 : index
    %c0_39 = arith.constant 0 : index
    %c0_40 = arith.constant 0 : index
    %116 = vector.load %arg4[%c3, %c0_39, %c0_40] : memref<4x8x32xbf16, #tpu.memory_space<vmem>>, vector<1x8x32xbf16>
    %117 = vector.shape_cast %116 : vector<1x8x32xbf16> to vector<8x32xbf16>
    %cst_41 = arith.constant dense<0.000000e+00> : vector<16x32xf32>
    %118 = tpu.matmul %115, %117, %cst_41 {dimension_numbers = #tpu.dot_dimension_numbers<[1], [0], [0], [1], [0, 0, 1, 1], [], []>} : vector<16x8xbf16>, vector<8x32xbf16>, vector<16x32xf32> -> vector<16x32xf32>
    %119 = arith.addf %93, %118 : vector<16x32xf32>
    %c0_42 = arith.constant 0 : index
    %c0_43 = arith.constant 0 : index
    %120 = vector.load %arg5[%c0_42, %c0_43] : memref<1x32xf32, #tpu.memory_space<vmem>>, vector<1x32xf32>
    %121 = vector.broadcast %120 : vector<1x32xf32> to vector<16x32xf32>
    %122 = arith.addf %119, %121 : vector<16x32xf32>
    %123 = arith.addf %1, %122 : vector<16x32xf32>
    %cst_44 = arith.constant dense<0.000000e+00> : vector<16xf32>
    %124 = vector.multi_reduction <add>, %123, %cst_44 [1] : vector<16x32xf32> to vector<16xf32>
    %125 = vector.shape_cast %124 : vector<16xf32> to vector<16x1xf32>
    %cst_45 = arith.constant 3.200000e+01 : f32
    %126 = vector.broadcast %cst_45 : f32 to vector<16x1xf32>
    %127 = arith.divf %125, %126 : vector<16x1xf32>
    %128 = vector.broadcast %127 : vector<16x1xf32> to vector<16x32xf32>
    %129 = arith.subf %123, %128 : vector<16x32xf32>
    %130 = arith.mulf %129, %129 : vector<16x32xf32>
    %cst_46 = arith.constant dense<0.000000e+00> : vector<16xf32>
    %131 = vector.multi_reduction <add>, %130, %cst_46 [1] : vector<16x32xf32> to vector<16xf32>
    %132 = vector.shape_cast %131 : vector<16xf32> to vector<16x1xf32>
    %cst_47 = arith.constant 3.200000e+01 : f32
    %133 = vector.broadcast %cst_47 : f32 to vector<16x1xf32>
    %134 = arith.divf %132, %133 : vector<16x1xf32>
    %135 = vector.broadcast %127 : vector<16x1xf32> to vector<16x32xf32>
    %136 = arith.subf %123, %135 : vector<16x32xf32>
    %cst_48 = arith.constant 9.99999974E-6 : f32
    %137 = vector.broadcast %cst_48 : f32 to vector<16x1xf32>
    %138 = arith.addf %134, %137 : vector<16x1xf32>
    %139 = math.rsqrt %138 : vector<16x1xf32>
    %140 = vector.broadcast %139 : vector<16x1xf32> to vector<16x32xf32>
    %141 = arith.mulf %136, %140 : vector<16x32xf32>
    %c0_49 = arith.constant 0 : index
    %c0_50 = arith.constant 0 : index
    %142 = vector.load %arg6[%c0_49, %c0_50] : memref<1x32xf32, #tpu.memory_space<vmem>>, vector<1x32xf32>
    %143 = vector.broadcast %142 : vector<1x32xf32> to vector<16x32xf32>
    %144 = arith.mulf %141, %143 : vector<16x32xf32>
    %c0_51 = arith.constant 0 : index
    %c0_52 = arith.constant 0 : index
    %145 = vector.load %arg7[%c0_51, %c0_52] : memref<1x32xf32, #tpu.memory_space<vmem>>, vector<1x32xf32>
    %146 = vector.broadcast %145 : vector<1x32xf32> to vector<16x32xf32>
    %147 = arith.addf %144, %146 : vector<16x32xf32>
    %148 = arith.truncf %147 : vector<16x32xf32> to vector<16x32xbf16>
    %c0_53 = arith.constant 0 : index
    %c0_54 = arith.constant 0 : index
    %149 = vector.load %arg8[%c0_53, %c0_54] : memref<32x128xbf16, #tpu.memory_space<vmem>>, vector<32x128xbf16>
    %cst_55 = arith.constant dense<0.000000e+00> : vector<16x128xf32>
    %150 = tpu.matmul %148, %149, %cst_55 {dimension_numbers = #tpu.dot_dimension_numbers<[1], [0], [0], [1], [0, 0, 1, 1], [], []>} : vector<16x32xbf16>, vector<32x128xbf16>, vector<16x128xf32> -> vector<16x128xf32>
    %c0_56 = arith.constant 0 : index
    %c0_57 = arith.constant 0 : index
    %151 = vector.load %arg9[%c0_56, %c0_57] : memref<1x128xf32, #tpu.memory_space<vmem>>, vector<1x128xf32>
    %152 = vector.broadcast %151 : vector<1x128xf32> to vector<16x128xf32>
    %153 = arith.addf %150, %152 : vector<16x128xf32>
    %cst_58 = arith.constant 0.000000e+00 : f32
    %154 = vector.broadcast %cst_58 : f32 to vector<16x128xf32>
    %155 = arith.maximumf %153, %154 : vector<16x128xf32>
    %156 = arith.truncf %155 : vector<16x128xf32> to vector<16x128xbf16>
    %c0_59 = arith.constant 0 : index
    %c0_60 = arith.constant 0 : index
    %157 = vector.load %arg10[%c0_59, %c0_60] : memref<128x32xbf16, #tpu.memory_space<vmem>>, vector<128x32xbf16>
    %cst_61 = arith.constant dense<0.000000e+00> : vector<16x32xf32>
    %158 = tpu.matmul %156, %157, %cst_61 {dimension_numbers = #tpu.dot_dimension_numbers<[1], [0], [0], [1], [0, 0, 1, 1], [], []>} : vector<16x128xbf16>, vector<128x32xbf16>, vector<16x32xf32> -> vector<16x32xf32>
    %c0_62 = arith.constant 0 : index
    %c0_63 = arith.constant 0 : index
    %159 = vector.load %arg11[%c0_62, %c0_63] : memref<1x32xf32, #tpu.memory_space<vmem>>, vector<1x32xf32>
    %160 = vector.broadcast %159 : vector<1x32xf32> to vector<16x32xf32>
    %161 = arith.addf %158, %160 : vector<16x32xf32>
    %162 = arith.addf %147, %161 : vector<16x32xf32>
    %cst_64 = arith.constant dense<0.000000e+00> : vector<16xf32>
    %163 = vector.multi_reduction <add>, %162, %cst_64 [1] : vector<16x32xf32> to vector<16xf32>
    %164 = vector.shape_cast %163 : vector<16xf32> to vector<16x1xf32>
    %cst_65 = arith.constant 3.200000e+01 : f32
    %165 = vector.broadcast %cst_65 : f32 to vector<16x1xf32>
    %166 = arith.divf %164, %165 : vector<16x1xf32>
    %167 = vector.broadcast %166 : vector<16x1xf32> to vector<16x32xf32>
    %168 = arith.subf %162, %167 : vector<16x32xf32>
    %169 = arith.mulf %168, %168 : vector<16x32xf32>
    %cst_66 = arith.constant dense<0.000000e+00> : vector<16xf32>
    %170 = vector.multi_reduction <add>, %169, %cst_66 [1] : vector<16x32xf32> to vector<16xf32>
    %171 = vector.shape_cast %170 : vector<16xf32> to vector<16x1xf32>
    %cst_67 = arith.constant 3.200000e+01 : f32
    %172 = vector.broadcast %cst_67 : f32 to vector<16x1xf32>
    %173 = arith.divf %171, %172 : vector<16x1xf32>
    %174 = vector.broadcast %166 : vector<16x1xf32> to vector<16x32xf32>
    %175 = arith.subf %162, %174 : vector<16x32xf32>
    %cst_68 = arith.constant 9.99999974E-6 : f32
    %176 = vector.broadcast %cst_68 : f32 to vector<16x1xf32>
    %177 = arith.addf %173, %176 : vector<16x1xf32>
    %178 = math.rsqrt %177 : vector<16x1xf32>
    %179 = vector.broadcast %178 : vector<16x1xf32> to vector<16x32xf32>
    %180 = arith.mulf %175, %179 : vector<16x32xf32>
    %c0_69 = arith.constant 0 : index
    %c0_70 = arith.constant 0 : index
    %181 = vector.load %arg12[%c0_69, %c0_70] : memref<1x32xf32, #tpu.memory_space<vmem>>, vector<1x32xf32>
    %182 = vector.broadcast %181 : vector<1x32xf32> to vector<16x32xf32>
    %183 = arith.mulf %180, %182 : vector<16x32xf32>
    %c0_71 = arith.constant 0 : index
    %c0_72 = arith.constant 0 : index
    %184 = vector.load %arg13[%c0_71, %c0_72] : memref<1x32xf32, #tpu.memory_space<vmem>>, vector<1x32xf32>
    %185 = vector.broadcast %184 : vector<1x32xf32> to vector<16x32xf32>
    %186 = arith.addf %183, %185 : vector<16x32xf32>
    %187 = vector.shape_cast %186 : vector<16x32xf32> to vector<2x8x32xf32>
    %c0_73 = arith.constant 0 : index
    %c0_74 = arith.constant 0 : index
    %c0_75 = arith.constant 0 : index
    %188 = vector.load %arg14[%c0_73, %c0_74, %c0_75] : memref<2x8x32xf32, #tpu.memory_space<vmem>>, vector<2x8x32xf32>
    tpu.vector_store %arg14[%c0_73, %c0_74, %c0_75], %187 {strides = array<i32>} : memref<2x8x32xf32, #tpu.memory_space<vmem>>, vector<2x8x32xf32>,
    return
  }
}

</mosaic_0001>

<llo_original>
// kernel: tpu_custom_call.1
$region0: #{tpu_custom_call.1}
  #allocation0 [shape = 'u32[]', space=smem, size = 0x4, offset = 0x4, fixed_abs, tag = 'smem constant byte address 0x4 - core index']
  #allocation1 [shape = 'u32[72,128]{1,0:T(1,128)}', space=vmem, size = 0x9000, scoped, tag = 'internal scratch']
  %s0 = inlined_call_operand.vmem [shape: f32[2,8,32], index: 0, kind: input, shape index: {}]
  %s1 = inlined_call_operand.vmem [shape: f32[2,8,8], index: 1, kind: input, shape index: {}]
  %s2 = inlined_call_operand.vmem [shape: bf16[32,96], index: 2, kind: input, shape index: {}]
  %s3 = inlined_call_operand.vmem [shape: f32[1,96], index: 3, kind: input, shape index: {}]
  %s4 = inlined_call_operand.vmem [shape: bf16[4,8,32], index: 4, kind: input, shape index: {}]
  %s5 = inlined_call_operand.vmem [shape: f32[1,32], index: 5, kind: input, shape index: {}]
  %s6 = inlined_call_operand.vmem [shape: f32[1,32], index: 6, kind: input, shape index: {}]
  %s7 = inlined_call_operand.vmem [shape: f32[1,32], index: 7, kind: input, shape index: {}]
  %s8 = inlined_call_operand.vmem [shape: bf16[32,128], index: 8, kind: input, shape index: {}]
  %s9 = inlined_call_operand.vmem [shape: f32[1,128], index: 9, kind: input, shape index: {}]
  %s10 = inlined_call_operand.vmem [shape: bf16[128,32], index: 10, kind: input, shape index: {}]
  %s11 = inlined_call_operand.vmem [shape: f32[1,32], index: 11, kind: input, shape index: {}]
  %s12 = inlined_call_operand.vmem [shape: f32[1,32], index: 12, kind: input, shape index: {}]
  %s13 = inlined_call_operand.vmem [shape: f32[1,32], index: 13, kind: input, shape index: {}]
  %s14 = inlined_call_operand.hbm [shape: f32[2,8,32], index: 14, kind: output, shape index: {}]
  %s15 = sld [smem:[#allocation0]]
  $region66: #{tpu_custom_call.1} parent=0
    _
  %s17 = ssub.s32 1, %s15
  %s18 = scalar_select 0, %s17, %s15
  $region1: #{tpu_custom_call.1} parent=0
    #allocation2 [shape = 'u8[8192]{0}', space=vmem, size = 0x2000, scoped, tag = 'output window, operand 0, single buffered']
    #allocation3 [shape = 's32[1]{0}', space=sflag, size = 0x4, scoped, tag = 'scoped memory for tpu_custom_call.1']
    %19 = vsyncpa [#allocation3], 0
    // Predicated region
    $region2: #{tpu_custom_call.1} parent=1 // pred_check
      _
    $region3: #{tpu_custom_call.1} parent=1 // pred_check_branch
      %21 = sbr.rel (0) target = $region5
    $region4: #{tpu_custom_call.1} parent=1 // pred_region
      _
    $region5: #{tpu_custom_call.1} parent=1 // pred_fallthru
      _
    // Predicated region
    $region6: #{tpu_custom_call.1} parent=1 // pred_check
      _
    $region7: #{tpu_custom_call.1} parent=1 // pred_check_branch
      %23 = sbr.rel (0) target = $region9
    $region8: #{tpu_custom_call.1} parent=1 // pred_region
      _
    $region9: #{tpu_custom_call.1} parent=1 // pred_fallthru
      _
    // Predicated region
    $region10: #{tpu_custom_call.1} parent=1 // pred_check
      _
    $region11: #{tpu_custom_call.1} parent=1 // pred_check_branch
      %25 = sbr.rel (0) target = $region13
    $region12: #{tpu_custom_call.1} parent=1 // pred_region
      _
    $region13: #{tpu_custom_call.1} parent=1 // pred_fallthru
      _
    // Predicated region
    $region14: #{tpu_custom_call.1} parent=1 // pred_check
      _
    $region15: #{tpu_custom_call.1} parent=1 // pred_check_branch
      %27 = sbr.rel (0) target = $region17
    $region16: #{tpu_custom_call.1} parent=1 // pred_region
      _
    $region17: #{tpu_custom_call.1} parent=1 // pred_fallthru
      _
    // Predicated region
    $region18: #{tpu_custom_call.1} parent=1 // pred_check
      _
    $region19: #{tpu_custom_call.1} parent=1 // pred_check_branch
      %29 = sbr.rel (0) target = $region21
    $region20: #{tpu_custom_call.1} parent=1 // pred_region
      _
    $region21: #{tpu_custom_call.1} parent=1 // pred_fallthru
      _
    // Predicated region
    $region22: #{tpu_custom_call.1} parent=1 // pred_check
      _
    $region23: #{tpu_custom_call.1} parent=1 // pred_check_branch
      %31 = sbr.rel (0) target = $region25
    $region24: #{tpu_custom_call.1} parent=1 // pred_region
      _
    $region25: #{tpu_custom_call.1} parent=1 // pred_fallthru
      _
    // Predicated region
    $region26: #{tpu_custom_call.1} parent=1 // pred_check
      _
    $region27: #{tpu_custom_call.1} parent=1 // pred_check_branch
      %33 = sbr.rel (0) target = $region29
    $region28: #{tpu_custom_call.1} parent=1 // pred_region
      _
    $region29: #{tpu_custom_call.1} parent=1 // pred_fallthru
      _
    // Predicated region
    $region30: #{tpu_custom_call.1} parent=1 // pred_check
      _
    $region31: #{tpu_custom_call.1} parent=1 // pred_check_branch
      %35 = sbr.rel (0) target = $region33
    $region32: #{tpu_custom_call.1} parent=1 // pred_region
      _
    $region33: #{tpu_custom_call.1} parent=1 // pred_fallthru
      _
    // Predicated region
    $region34: #{tpu_custom_call.1} parent=1 // pred_check
      _
    $region35: #{tpu_custom_call.1} parent=1 // pred_check_branch
      %37 = sbr.rel (0) target = $region37
    $region36: #{tpu_custom_call.1} parent=1 // pred_region
      _
    $region37: #{tpu_custom_call.1} parent=1 // pred_fallthru
      _
    // Predicated region
    $region38: #{tpu_custom_call.1} parent=1 // pred_check
      _
    $region39: #{tpu_custom_call.1} parent=1 // pred_check_branch
      %39 = sbr.rel (0) target = $region41
    $region40: #{tpu_custom_call.1} parent=1 // pred_region
      _
    $region41: #{tpu_custom_call.1} parent=1 // pred_fallthru
      _
    // Predicated region
    $region42: #{tpu_custom_call.1} parent=1 // pred_check
      _
    $region43: #{tpu_custom_call.1} parent=1 // pred_check_branch
      %41 = sbr.rel (0) target = $region45
    $region44: #{tpu_custom_call.1} parent=1 // pred_region
      _
    $region45: #{tpu_custom_call.1} parent=1 // pred_fallthru
      _
    // Predicated region
    $region46: #{tpu_custom_call.1} parent=1 // pred_check
      _
    $region47: #{tpu_custom_call.1} parent=1 // pred_check_branch
      %43 = sbr.rel (0) target = $region49
    $region48: #{tpu_custom_call.1} parent=1 // pred_region
      _
    $region49: #{tpu_custom_call.1} parent=1 // pred_fallthru
      _
    // Predicated region
    $region50: #{tpu_custom_call.1} parent=1 // pred_check
      _
    $region51: #{tpu_custom_call.1} parent=1 // pred_check_branch
      %45 = sbr.rel (0) target = $region53
    $region52: #{tpu_custom_call.1} parent=1 // pred_region
      _
    $region53: #{tpu_custom_call.1} parent=1 // pred_fallthru
      _
    // Predicated region
    $region54: #{tpu_custom_call.1} parent=1 // pred_check
      _
    $region55: #{tpu_custom_call.1} parent=1 // pred_check_branch
      %47 = sbr.rel (0) target = $region57
    $region56: #{tpu_custom_call.1} parent=1 // pred_region
      _
    $region57: #{tpu_custom_call.1} parent=1 // pred_fallthru
      _
    %v49 = vld [vmem:[%s0] sm:$0xff]
    %v50 = vld [vmem:[%s0 + $0x8] sm:$0xff]
    %v51 = vpack.c.bf16 %v50, %v49
    %v52 = vld [vmem:[%s2] sm:$0xf]
    %v53 = vld [vmem:[%s2 + $0x4] sm:$0xf]
    %v54 = vld [vmem:[%s2 + $0x8] sm:$0xf]
    %v55 = vld [vmem:[%s2 + $0xc] sm:$0xf]
    %v56 = vld [vmem:[%s3] sm:$0x1]
    %v58 = vperm.slane %v56, 0
    %v64 = vunpack.c.l.b16 %v52
    %v65 = vunpack.c.l.b16 %v53
    %v66 = vunpack.c.l.b16 %v54
    %v67 = vunpack.c.l.b16 %v55
    %v68 = vpack.c.b16 %v65, %v64
    %v69 = vpack.c.b16 %v67, %v66
    %vm72 = vcmask 261120
    %v74 = vsel %vm72, %v51, 0
    %76 = vmatpush.bf16.msra.mxu0 0
    %77 = vmatpush.bf16.msra.mxu0 0
    %78 = vmatpush.bf16.msra.mxu0 0
    %79 = vmatpush.bf16.msra.mxu0 0
    %80 = vmatpush.bf16.msra.mxu0 0
    %81 = vmatpush.bf16.msra.mxu0 0
    %82 = vmatpush.bf16.msra.mxu0 %v69
    %83 = vmatpush.bf16.msra.mxu0 %v68
    %84 = vmatmul.bf16.gmra.mxu0 %v74
    %v85 = vpop.f32.mrf.mxu0
    %v86 = vadd.f32 %v58, %v85
    %v87 = vpop.f32.mrf.mxu0
    %v88 = vadd.f32 %v58, %v87
    %89 = vdwg.mxu0
    %v90 = vld [vmem:[%s1] sm:$0xff]
    %v91 = vld [vmem:[%s1 + $0x8] sm:$0xff]
    %vm92 = vcmp.eq.f32.partialorder %v90, 0.0
    %vm93 = vcmp.eq.f32.partialorder %v91, 0.0
    %v94 = vsel %vm92, -1e+09, 0.0
    %v95 = vsel %vm93, -1e+09, 0.0
    %v96 = vpack.c.bf16 %v86, %v86
    %v97 = vpack.c.bf16 %v88, %v88
    %v99 = vunpack.c.l.b16 %v96
    %v100 = vpack.c.b16 %v99, %v99
    %101 = vrot.lane.b32.xlu0 %v100, 96
    %v102 = vpop.permute.xlu0 %101
    %vm103 = vcmask 64512
    %v105 = vsel %vm103, %v96, 0
    %v108 = vsel %vm103, %v102, 0
    %110 = vmatpush.bf16.xpose.msra.mxu0 0
    %111 = vmatpush.bf16.xpose.msra.mxu0 0
    %112 = vmatpush.bf16.xpose.msra.mxu0 0
    %113 = vmatpush.bf16.xpose.msra.mxu0 0
    %114 = vmatpush.bf16.xpose.msra.mxu0 0
    %115 = vmatpush.bf16.xpose.msra.mxu0 0
    %116 = vmatpush.bf16.xpose.msra.mxu0 0
    %117 = vmatpush.bf16.xpose.msra.mxu0 %v108
    %118 = vmatmul.bf16.gmra.mxu0 %v105
    %v119 = vpop.f32.mrf.mxu0
    %v120 = vadd.f32 %v94, %v119
    %v121 = vpop.f32.mrf.mxu0
    %122 = vdwg.mxu0
    %v124 = vunpack.c.l.b16 %v97
    %v125 = vpack.c.b16 %v124, %v124
    %126 = vrot.lane.b32.xlu0 %v125, 96
    %v127 = vpop.permute.xlu0 %126
    %v129 = vsel %vm103, %v97, 0
    %v132 = vsel %vm103, %v127, 0
    %134 = vmatpush.bf16.xpose.msra.mxu0 0
    %135 = vmatpush.bf16.xpose.msra.mxu0 0
    %136 = vmatpush.bf16.xpose.msra.mxu0 0
    %137 = vmatpush.bf16.xpose.msra.mxu0 0
    %138 = vmatpush.bf16.xpose.msra.mxu0 0
    %139 = vmatpush.bf16.xpose.msra.mxu0 0
    %140 = vmatpush.bf16.xpose.msra.mxu0 0
    %141 = vmatpush.bf16.xpose.msra.mxu0 %v132
    %142 = vmatmul.bf16.gmra.mxu0 %v129
    %v143 = vpop.f32.mrf.mxu0
    %v144 = vadd.f32 %v95, %v143
    %v145 = vpop.f32.mrf.mxu0
    %146 = vdwg.mxu0
    %v147 = vsel %vm103, %v120, -inf
    %148 = vmax.xlane.f32.xlu0 %v147
    %v149 = vpop.xlane.xlu0 %148
    %v150 = vsel %vm103, %v144, -inf
    %151 = vmax.xlane.f32.xlu0 %v150
    %v152 = vpop.xlane.xlu0 %151
    %v153 = vsub.f32 %v120, %v149
    %v154 = vsub.f32 %v144, %v152
    %v155 = vmul.f32 %v153, 1.442695
    %v156 = vpow.pop %v155
    %v157 = vmul.f32 %v154, 1.442695
    %v158 = vpow.pop %v157
    %v159 = vsel %vm103, %v156, 0.0
    %160 = vadd.xlane.f32.xlu0 %v159
    %v161 = vpop.xlane.xlu0 %160
    %v162 = vsel %vm103, %v158, 0.0
    %163 = vadd.xlane.f32.xlu0 %v162
    %v164 = vpop.xlane.xlu0 %163
    %v165 = vrcp.pop %v161
    %v166 = vrcp.pop %v164
    %v167 = vmul.f32 %v156, %v165
    %v168 = vmul.f32 %v158, %v166
    %v169 = vpack.c.bf16 %v167, %v167
    %v170 = vpack.c.bf16 %v168, %v168
    %171 = vrot.lane.b32.xlu0 %v100, 64
    %v172 = vpop.permute.xlu0 %171
    %v174 = vsel %vm103, %v169, 0
    %vm176 = vcmask 1043456
    %v178 = vsel %vm176, %v172, 0
    %180 = vmatpush.bf16.msra.mxu0 0
    %181 = vmatpush.bf16.msra.mxu0 0
    %182 = vmatpush.bf16.msra.mxu0 0
    %183 = vmatpush.bf16.msra.mxu0 0
    %184 = vmatpush.bf16.msra.mxu0 0
    %185 = vmatpush.bf16.msra.mxu0 0
    %186 = vmatpush.bf16.msra.mxu0 0
    %187 = vmatpush.bf16.msra.mxu0 %v178
    %188 = vmatmul.bf16.gmra.mxu0 %v174
    %v189 = vpop.f32.mrf.mxu0
    %v190 = vadd.f32 0.0, %v189
    %v191 = vpop.f32.mrf.mxu0
    %192 = vdwg.mxu0
    %193 = vrot.lane.b32.xlu0 %v125, 64
    %v194 = vpop.permute.xlu0 %193
    %v196 = vsel %vm103, %v170, 0
    %v199 = vsel %vm176, %v194, 0
    %201 = vmatpush.bf16.msra.mxu0 0
    %202 = vmatpush.bf16.msra.mxu0 0
    %203 = vmatpush.bf16.msra.mxu0 0
    %204 = vmatpush.bf16.msra.mxu0 0
    %205 = vmatpush.bf16.msra.mxu0 0
    %206 = vmatpush.bf16.msra.mxu0 0
    %207 = vmatpush.bf16.msra.mxu0 0
    %208 = vmatpush.bf16.msra.mxu0 %v199
    %209 = vmatmul.bf16.gmra.mxu0 %v196
    %v210 = vpop.f32.mrf.mxu0
    %v211 = vadd.f32 0.0, %v210
    %v212 = vpop.f32.mrf.mxu0
    %213 = vdwg.mxu0
    %v214 = vpack.c.bf16 %v211, %v190
    %v215 = vld [vmem:[%s4] sm:$0xf]
    %216 = vrot.lane.b32.xlu0 %v100, 120
    %v217 = vpop.permute.xlu0 %216
    %218 = vrot.lane.b32.xlu0 %v100, 88
    %v219 = vpop.permute.xlu0 %218
    %v221 = vsel %vm103, %v217, 0
    %v224 = vsel %vm103, %v219, 0
    %226 = vmatpush.bf16.xpose.msra.mxu0 0
    %227 = vmatpush.bf16.xpose.msra.mxu0 0
    %228 = vmatpush.bf16.xpose.msra.mxu0 0
    %229 = vmatpush.bf16.xpose.msra.mxu0 0
    %230 = vmatpush.bf16.xpose.msra.mxu0 0
    %231 = vmatpush.bf16.xpose.msra.mxu0 0
    %232 = vmatpush.bf16.xpose.msra.mxu0 0
    %233 = vmatpush.bf16.xpose.msra.mxu0 %v224
    %234 = vmatmul.bf16.gmra.mxu0 %v221
    %v235 = vpop.f32.mrf.mxu0
    %v236 = vadd.f32 %v94, %v235
    %v237 = vpop.f32.mrf.mxu0
    %238 = vdwg.mxu0
    %239 = vrot.lane.b32.xlu0 %v125, 120
    %v240 = vpop.permute.xlu0 %239
    %241 = vrot.lane.b32.xlu0 %v125, 88
    %v242 = vpop.permute.xlu0 %241
    %v244 = vsel %vm103, %v240, 0
    %v247 = vsel %vm103, %v242, 0
    %249 = vmatpush.bf16.xpose.msra.mxu0 0
    %250 = vmatpush.bf16.xpose.msra.mxu0 0
    %251 = vmatpush.bf16.xpose.msra.mxu0 0
    %252 = vmatpush.bf16.xpose.msra.mxu0 0
    %253 = vmatpush.bf16.xpose.msra.mxu0 0
    %254 = vmatpush.bf16.xpose.msra.mxu0 0
    %255 = vmatpush.bf16.xpose.msra.mxu0 0
    %256 = vmatpush.bf16.xpose.msra.mxu0 %v247
    %257 = vmatmul.bf16.gmra.mxu0 %v244
    %v258 = vpop.f32.mrf.mxu0
    %v259 = vadd.f32 %v95, %v258
    %v260 = vpop.f32.mrf.mxu0
    %261 = vdwg.mxu0
    %v262 = vsel %vm103, %v236, -inf
    %263 = vmax.xlane.f32.xlu0 %v262
    %v264 = vpop.xlane.xlu0 %263
    %v265 = vsel %vm103, %v259, -inf
    %266 = vmax.xlane.f32.xlu0 %v265
    %v267 = vpop.xlane.xlu0 %266
    %v268 = vsub.f32 %v236, %v264
    %v269 = vsub.f32 %v259, %v267
    %v270 = vmul.f32 %v268, 1.442695
    %v271 = vpow.pop %v270
    %v272 = vmul.f32 %v269, 1.442695
    %v273 = vpow.pop %v272
    %v274 = vsel %vm103, %v271, 0.0
    %275 = vadd.xlane.f32.xlu0 %v274
    %v276 = vpop.xlane.xlu0 %275
    %v277 = vsel %vm103, %v273, 0.0
    %278 = vadd.xlane.f32.xlu0 %v277
    %v279 = vpop.xlane.xlu0 %278
    %v280 = vrcp.pop %v276
    %v281 = vrcp.pop %v279
    %v282 = vmul.f32 %v271, %v280
    %v283 = vmul.f32 %v273, %v281
    %v284 = vpack.c.bf16 %v282, %v282
    %v285 = vpack.c.bf16 %v283, %v283
    %286 = vrot.lane.b32.xlu0 %v100, 56
    %v287 = vpop.permute.xlu0 %286
    %v289 = vsel %vm103, %v284, 0
    %v292 = vsel %vm176, %v287, 0
    %294 = vmatpush.bf16.msra.mxu0 0
    %295 = vmatpush.bf16.msra.mxu0 0
    %296 = vmatpush.bf16.msra.mxu0 0
    %297 = vmatpush.bf16.msra.mxu0 0
    %298 = vmatpush.bf16.msra.mxu0 0
    %299 = vmatpush.bf16.msra.mxu0 0
    %300 = vmatpush.bf16.msra.mxu0 0
    %301 = vmatpush.bf16.msra.mxu0 %v292
    %302 = vmatmul.bf16.gmra.mxu0 %v289
    %v303 = vpop.f32.mrf.mxu0
    %v304 = vadd.f32 0.0, %v303
    %v305 = vpop.f32.mrf.mxu0
    %306 = vdwg.mxu0
    %307 = vrot.lane.b32.xlu0 %v125, 56
    %v308 = vpop.permute.xlu0 %307
    %v310 = vsel %vm103, %v285, 0
    %v313 = vsel %vm176, %v308, 0
    %315 = vmatpush.bf16.msra.mxu0 0
    %316 = vmatpush.bf16.msra.mxu0 0
    %317 = vmatpush.bf16.msra.mxu0 0
    %318 = vmatpush.bf16.msra.mxu0 0
    %319 = vmatpush.bf16.msra.mxu0 0
    %320 = vmatpush.bf16.msra.mxu0 0
    %321 = vmatpush.bf16.msra.mxu0 0
    %322 = vmatpush.bf16.msra.mxu0 %v313
    %323 = vmatmul.bf16.gmra.mxu0 %v310
    %v324 = vpop.f32.mrf.mxu0
    %v325 = vadd.f32 0.0, %v324
    %v326 = vpop.f32.mrf.mxu0
    %327 = vdwg.mxu0
    %v328 = vpack.c.bf16 %v325, %v304
    %s329 = scalar_lea.vmem %s4, 4
    %v330 = vld [vmem:[%s329] sm:$0xf]
    %v332 = vsel %vm103, %v328, 0
    %v335 = vsel %vm176, %v330, 0
    %337 = vmatpush.bf16.msra.mxu0 0
    %338 = vmatpush.bf16.msra.mxu0 0
    %339 = vmatpush.bf16.msra.mxu0 0
    %340 = vmatpush.bf16.msra.mxu0 0
    %341 = vmatpush.bf16.msra.mxu0 0
    %342 = vmatpush.bf16.msra.mxu0 0
    %343 = vmatpush.bf16.msra.mxu0 0
    %344 = vmatpush.bf16.msra.mxu0 %v335
    %345 = vmatmul.bf16.gmra.mxu0 %v332
    %v346 = vpop.f32.mrf.mxu0
    %v347 = vadd.f32 0.0, %v346
    %v348 = vpop.f32.mrf.mxu0
    %v349 = vadd.f32 0.0, %v348
    %350 = vdwg.mxu0
    %v352 = vsel %vm103, %v214, 0
    %v355 = vsel %vm176, %v215, 0
    %357 = vmatpush.bf16.msra.mxu0 0
    %358 = vmatpush.bf16.msra.mxu0 0
    %359 = vmatpush.bf16.msra.mxu0 0
    %360 = vmatpush.bf16.msra.mxu0 0
    %361 = vmatpush.bf16.msra.mxu0 0
    %362 = vmatpush.bf16.msra.mxu0 0
    %363 = vmatpush.bf16.msra.mxu0 0
    %364 = vmatpush.bf16.msra.mxu0 %v355
    %365 = vmatmul.bf16.gmra.mxu0 %v352
    %v366 = vpop.f32.mrf.mxu0
    %v367 = vadd.f32 %v347, %v366
    %v368 = vpop.f32.mrf.mxu0
    %v369 = vadd.f32 %v349, %v368
    %370 = vdwg.mxu0
    %371 = vrot.lane.b32.xlu0 %v100, 112
    %v372 = vpop.permute.xlu0 %371
    %373 = vrot.lane.b32.xlu0 %v100, 80
    %v374 = vpop.permute.xlu0 %373
    %v376 = vsel %vm103, %v372, 0
    %v379 = vsel %vm103, %v374, 0
    %381 = vmatpush.bf16.xpose.msra.mxu0 0
    %382 = vmatpush.bf16.xpose.msra.mxu0 0
    %383 = vmatpush.bf16.xpose.msra.mxu0 0
    %384 = vmatpush.bf16.xpose.msra.mxu0 0
    %385 = vmatpush.bf16.xpose.msra.mxu0 0
    %386 = vmatpush.bf16.xpose.msra.mxu0 0
    %387 = vmatpush.bf16.xpose.msra.mxu0 0
    %388 = vmatpush.bf16.xpose.msra.mxu0 %v379
    %389 = vmatmul.bf16.gmra.mxu0 %v376
    %v390 = vpop.f32.mrf.mxu0
    %v391 = vadd.f32 %v94, %v390
    %v392 = vpop.f32.mrf.mxu0
    %393 = vdwg.mxu0
    %394 = vrot.lane.b32.xlu0 %v125, 112
    %v395 = vpop.permute.xlu0 %394
    %396 = vrot.lane.b32.xlu0 %v125, 80
    %v397 = vpop.permute.xlu0 %396
    %v399 = vsel %vm103, %v395, 0
    %v402 = vsel %vm103, %v397, 0
    %404 = vmatpush.bf16.xpose.msra.mxu0 0
    %405 = vmatpush.bf16.xpose.msra.mxu0 0
    %406 = vmatpush.bf16.xpose.msra.mxu0 0
    %407 = vmatpush.bf16.xpose.msra.mxu0 0
    %408 = vmatpush.bf16.xpose.msra.mxu0 0
    %409 = vmatpush.bf16.xpose.msra.mxu0 0
    %410 = vmatpush.bf16.xpose.msra.mxu0 0
    %411 = vmatpush.bf16.xpose.msra.mxu0 %v402
    %412 = vmatmul.bf16.gmra.mxu0 %v399
    %v413 = vpop.f32.mrf.mxu0
    %v414 = vadd.f32 %v95, %v413
    %v415 = vpop.f32.mrf.mxu0
    %416 = vdwg.mxu0
    %v417 = vsel %vm103, %v391, -inf
    %418 = vmax.xlane.f32.xlu0 %v417
    %v419 = vpop.xlane.xlu0 %418
    %v420 = vsel %vm103, %v414, -inf
    %421 = vmax.xlane.f32.xlu0 %v420
    %v422 = vpop.xlane.xlu0 %421
    %v423 = vsub.f32 %v391, %v419
    %v424 = vsub.f32 %v414, %v422
    %v425 = vmul.f32 %v423, 1.442695
    %v426 = vpow.pop %v425
    %v427 = vmul.f32 %v424, 1.442695
    %v428 = vpow.pop %v427
    %v429 = vsel %vm103, %v426, 0.0
    %430 = vadd.xlane.f32.xlu0 %v429
    %v431 = vpop.xlane.xlu0 %430
    %v432 = vsel %vm103, %v428, 0.0
    %433 = vadd.xlane.f32.xlu0 %v432
    %v434 = vpop.xlane.xlu0 %433
    %v435 = vrcp.pop %v431
    %v436 = vrcp.pop %v434
    %v437 = vmul.f32 %v426, %v435
    %v438 = vmul.f32 %v428, %v436
    %v439 = vpack.c.bf16 %v437, %v437
    %v440 = vpack.c.bf16 %v438, %v438
    %441 = vrot.lane.b32.xlu0 %v100, 48
    %v442 = vpop.permute.xlu0 %441
    %v444 = vsel %vm103, %v439, 0
    %v447 = vsel %vm176, %v442, 0
    %449 = vmatpush.bf16.msra.mxu0 0
    %450 = vmatpush.bf16.msra.mxu0 0
    %451 = vmatpush.bf16.msra.mxu0 0
    %452 = vmatpush.bf16.msra.mxu0 0
    %453 = vmatpush.bf16.msra.mxu0 0
    %454 = vmatpush.bf16.msra.mxu0 0
    %455 = vmatpush.bf16.msra.mxu0 0
    %456 = vmatpush.bf16.msra.mxu0 %v447
    %457 = vmatmul.bf16.gmra.mxu0 %v444
    %v458 = vpop.f32.mrf.mxu0
    %v459 = vadd.f32 0.0, %v458
    %v460 = vpop.f32.mrf.mxu0
    %461 = vdwg.mxu0
    %462 = vrot.lane.b32.xlu0 %v125, 48
    %v463 = vpop.permute.xlu0 %462
    %v465 = vsel %vm103, %v440, 0
    %v468 = vsel %vm176, %v463, 0
    %470 = vmatpush.bf16.msra.mxu0 0
    %471 = vmatpush.bf16.msra.mxu0 0
    %472 = vmatpush.bf16.msra.mxu0 0
    %473 = vmatpush.bf16.msra.mxu0 0
    %474 = vmatpush.bf16.msra.mxu0 0
    %475 = vmatpush.bf16.msra.mxu0 0
    %476 = vmatpush.bf16.msra.mxu0 0
    %477 = vmatpush.bf16.msra.mxu0 %v468
    %478 = vmatmul.bf16.gmra.mxu0 %v465
    %v479 = vpop.f32.mrf.mxu0
    %v480 = vadd.f32 0.0, %v479
    %v481 = vpop.f32.mrf.mxu0
    %482 = vdwg.mxu0
    %v483 = vpack.c.bf16 %v480, %v459
    %s484 = scalar_lea.vmem %s4, 8
    %v485 = vld [vmem:[%s484] sm:$0xf]
    %v487 = vsel %vm103, %v483, 0
    %v490 = vsel %vm176, %v485, 0
    %492 = vmatpush.bf16.msra.mxu0 0
    %493 = vmatpush.bf16.msra.mxu0 0
    %494 = vmatpush.bf16.msra.mxu0 0
    %495 = vmatpush.bf16.msra.mxu0 0
    %496 = vmatpush.bf16.msra.mxu0 0
    %497 = vmatpush.bf16.msra.mxu0 0
    %498 = vmatpush.bf16.msra.mxu0 0
    %499 = vmatpush.bf16.msra.mxu0 %v490
    %500 = vmatmul.bf16.gmra.mxu0 %v487
    %v501 = vpop.f32.mrf.mxu0
    %v502 = vadd.f32 0.0, %v501
    %v503 = vpop.f32.mrf.mxu0
    %v504 = vadd.f32 0.0, %v503
    %505 = vdwg.mxu0
    %v506 = vadd.f32 %v367, %v502
    %v507 = vadd.f32 %v369, %v504
    %508 = vrot.lane.b32.xlu0 %v100, 104
    %v509 = vpop.permute.xlu0 %508
    %510 = vrot.lane.b32.xlu0 %v100, 72
    %v511 = vpop.permute.xlu0 %510
    %v513 = vsel %vm103, %v509, 0
    %v516 = vsel %vm103, %v511, 0
    %518 = vmatpush.bf16.xpose.msra.mxu0 0
    %519 = vmatpush.bf16.xpose.msra.mxu0 0
    %520 = vmatpush.bf16.xpose.msra.mxu0 0
    %521 = vmatpush.bf16.xpose.msra.mxu0 0
    %522 = vmatpush.bf16.xpose.msra.mxu0 0
    %523 = vmatpush.bf16.xpose.msra.mxu0 0
    %524 = vmatpush.bf16.xpose.msra.mxu0 0
    %525 = vmatpush.bf16.xpose.msra.mxu0 %v516
    %526 = vmatmul.bf16.gmra.mxu0 %v513
    %v527 = vpop.f32.mrf.mxu0
    %v528 = vadd.f32 %v94, %v527
    %v529 = vpop.f32.mrf.mxu0
    %530 = vdwg.mxu0
    %531 = vrot.lane.b32.xlu0 %v125, 104
    %v532 = vpop.permute.xlu0 %531
    %533 = vrot.lane.b32.xlu0 %v125, 72
    %v534 = vpop.permute.xlu0 %533
    %v536 = vsel %vm103, %v532, 0
    %v539 = vsel %vm103, %v534, 0
    %541 = vmatpush.bf16.xpose.msra.mxu0 0
    %542 = vmatpush.bf16.xpose.msra.mxu0 0
    %543 = vmatpush.bf16.xpose.msra.mxu0 0
    %544 = vmatpush.bf16.xpose.msra.mxu0 0
    %545 = vmatpush.bf16.xpose.msra.mxu0 0
    %546 = vmatpush.bf16.xpose.msra.mxu0 0
    %547 = vmatpush.bf16.xpose.msra.mxu0 0
    %548 = vmatpush.bf16.xpose.msra.mxu0 %v539
    %549 = vmatmul.bf16.gmra.mxu0 %v536
    %v550 = vpop.f32.mrf.mxu0
    %v551 = vadd.f32 %v95, %v550
    %v552 = vpop.f32.mrf.mxu0
    %553 = vdwg.mxu0
    %v554 = vsel %vm103, %v528, -inf
    %555 = vmax.xlane.f32.xlu0 %v554
    %v556 = vpop.xlane.xlu0 %555
    %v557 = vsel %vm103, %v551, -inf
    %558 = vmax.xlane.f32.xlu0 %v557
    %v559 = vpop.xlane.xlu0 %558
    %v560 = vsub.f32 %v528, %v556
    %v561 = vsub.f32 %v551, %v559
    %v562 = vmul.f32 %v560, 1.442695
    %v563 = vpow.pop %v562
    %v564 = vmul.f32 %v561, 1.442695
    %v565 = vpow.pop %v564
    %v566 = vsel %vm103, %v563, 0.0
    %567 = vadd.xlane.f32.xlu0 %v566
    %v568 = vpop.xlane.xlu0 %567
    %v569 = vsel %vm103, %v565, 0.0
    %570 = vadd.xlane.f32.xlu0 %v569
    %v571 = vpop.xlane.xlu0 %570
    %v572 = vrcp.pop %v568
    %v573 = vrcp.pop %v571
    %v574 = vmul.f32 %v563, %v572
    %v575 = vmul.f32 %v565, %v573
    %v576 = vpack.c.bf16 %v574, %v574
    %v577 = vpack.c.bf16 %v575, %v575
    %578 = vrot.lane.b32.xlu0 %v100, 40
    %v579 = vpop.permute.xlu0 %578
    %v581 = vsel %vm103, %v576, 0
    %v584 = vsel %vm176, %v579, 0
    %586 = vmatpush.bf16.msra.mxu0 0
    %587 = vmatpush.bf16.msra.mxu0 0
    %588 = vmatpush.bf16.msra.mxu0 0
    %589 = vmatpush.bf16.msra.mxu0 0
    %590 = vmatpush.bf16.msra.mxu0 0
    %591 = vmatpush.bf16.msra.mxu0 0
    %592 = vmatpush.bf16.msra.mxu0 0
    %593 = vmatpush.bf16.msra.mxu0 %v584
    %594 = vmatmul.bf16.gmra.mxu0 %v581
    %v595 = vpop.f32.mrf.mxu0
    %v596 = vadd.f32 0.0, %v595
    %v597 = vpop.f32.mrf.mxu0
    %598 = vdwg.mxu0
    %599 = vrot.lane.b32.xlu0 %v125, 40
    %v600 = vpop.permute.xlu0 %599
    %v602 = vsel %vm103, %v577, 0
    %v605 = vsel %vm176, %v600, 0
    %607 = vmatpush.bf16.msra.mxu0 0
    %608 = vmatpush.bf16.msra.mxu0 0
    %609 = vmatpush.bf16.msra.mxu0 0
    %610 = vmatpush.bf16.msra.mxu0 0
    %611 = vmatpush.bf16.msra.mxu0 0
    %612 = vmatpush.bf16.msra.mxu0 0
    %613 = vmatpush.bf16.msra.mxu0 0
    %614 = vmatpush.bf16.msra.mxu0 %v605
    %615 = vmatmul.bf16.gmra.mxu0 %v602
    %v616 = vpop.f32.mrf.mxu0
    %v617 = vadd.f32 0.0, %v616
    %v618 = vpop.f32.mrf.mxu0
    %619 = vdwg.mxu0
    %v620 = vpack.c.bf16 %v617, %v596
    %s621 = scalar_lea.vmem %s4, 12
    %v622 = vld [vmem:[%s621] sm:$0xf]
    %v624 = vsel %vm103, %v620, 0
    %v627 = vsel %vm176, %v622, 0
    %629 = vmatpush.bf16.msra.mxu0 0
    %630 = vmatpush.bf16.msra.mxu0 0
    %631 = vmatpush.bf16.msra.mxu0 0
    %632 = vmatpush.bf16.msra.mxu0 0
    %633 = vmatpush.bf16.msra.mxu0 0
    %634 = vmatpush.bf16.msra.mxu0 0
    %635 = vmatpush.bf16.msra.mxu0 0
    %636 = vmatpush.bf16.msra.mxu0 %v627
    %637 = vmatmul.bf16.gmra.mxu0 %v624
    %v638 = vpop.f32.mrf.mxu0
    %v639 = vadd.f32 0.0, %v638
    %v640 = vpop.f32.mrf.mxu0
    %v641 = vadd.f32 0.0, %v640
    %642 = vdwg.mxu0
    %v643 = vadd.f32 %v506, %v639
    %v644 = vadd.f32 %v507, %v641
    %v645 = vld [vmem:[%s5] sm:$0x1]
    %v647 = vperm.slane %v645, 0
    %v649 = vadd.f32 %v643, %v647
    %v650 = vadd.f32 %v644, %v647
    %v651 = vadd.f32 %v49, %v649
    %v652 = vadd.f32 %v50, %v650
    %v653 = vsel %vm72, %v651, 0.0
    %654 = vadd.xlane.f32.xlu0 %v653
    %v655 = vpop.xlane.xlu0 %654
    %v656 = vsel %vm72, %v652, 0.0
    %657 = vadd.xlane.f32.xlu0 %v656
    %v658 = vpop.xlane.xlu0 %657
    %v659 = vrcp.pop 32.0
    %v660 = vmul.f32 32.0, %v659
    %v661 = vsub.f32 1.0, %v660
    %v662 = vmul.f32 %v659, %v661
    %v663 = vadd.f32 %v659, %v662
    %vm664 = vweird.f32 %v659
    %v665 = vsel %vm664, %v659, %v663
    %v666 = vmul.f32 %v655, %v665
    %v667 = vmul.f32 %v658, %v665
    %v668 = vsub.f32 %v651, %v666
    %v669 = vsub.f32 %v652, %v667
    %v670 = vmul.f32 %v668, %v668
    %v671 = vmul.f32 %v669, %v669
    %v672 = vsel %vm72, %v670, 0.0
    %673 = vadd.xlane.f32.xlu0 %v672
    %v674 = vpop.xlane.xlu0 %673
    %v675 = vsel %vm72, %v671, 0.0
    %676 = vadd.xlane.f32.xlu0 %v675
    %v677 = vpop.xlane.xlu0 %676
    %v678 = vmul.f32 %v674, %v665
    %v679 = vmul.f32 %v677, %v665
    %v680 = vadd.f32 %v678, 1e-05
    %v681 = vadd.f32 %v679, 1e-05
    %v682 = vrsqrt.pop %v680
    %v683 = vmul.f32 %v682, %v680
    %v684 = vmul.f32 %v683, %v682
    %v685 = vmul.f32 0.5, %v684
    %v686 = vsub.f32 1.5, %v685
    %v687 = vmul.f32 %v682, %v686
    %vm688 = vweird.f32 %v680
    %vm689 = vweird.f32 %v682
    %vm690 = vmor %vm688, %vm689
    %v691 = vsel %vm690, %v682, %v687
    %v692 = vrsqrt.pop %v681
    %v693 = vmul.f32 %v692, %v681
    %v694 = vmul.f32 %v693, %v692
    %v695 = vmul.f32 0.5, %v694
    %v696 = vsub.f32 1.5, %v695
    %v697 = vmul.f32 %v692, %v696
    %vm698 = vweird.f32 %v681
    %vm699 = vweird.f32 %v692
    %vm700 = vmor %vm698, %vm699
    %v701 = vsel %vm700, %v692, %v697
    %v702 = vmul.f32 %v668, %v691
    %v703 = vmul.f32 %v669, %v701
    %v704 = vld [vmem:[%s6] sm:$0x1]
    %v706 = vperm.slane %v704, 0
    %v708 = vmul.f32 %v702, %v706
    %v709 = vmul.f32 %v703, %v706
    %v710 = vld [vmem:[%s7] sm:$0x1]
    %v712 = vperm.slane %v710, 0
    %v714 = vadd.f32 %v708, %v712
    %v715 = vadd.f32 %v709, %v712
    %v716 = vpack.c.bf16 %v715, %v714
    %v717 = vld [vmem:[%s8] sm:$0xf]
    %v718 = vld [vmem:[%s8 + $0x4] sm:$0xf]
    %v719 = vld [vmem:[%s8 + $0x8] sm:$0xf]
    %v720 = vld [vmem:[%s8 + $0xc] sm:$0xf]
    %v721 = vld [vmem:[%s9] sm:$0x1]
    %v723 = vperm.slane %v721, 0
    %v729 = vunpack.c.l.b16 %v717
    %v730 = vunpack.c.l.b16 %v718
    %v731 = vunpack.c.l.b16 %v719
    %v732 = vunpack.c.l.b16 %v720
    %v733 = vpack.c.b16 %v730, %v729
    %v734 = vpack.c.b16 %v732, %v731
    %v738 = vsel %vm72, %v716, 0
    %740 = vmatpush.bf16.msra.mxu0 0
    %741 = vmatpush.bf16.msra.mxu0 0
    %742 = vmatpush.bf16.msra.mxu0 0
    %743 = vmatpush.bf16.msra.mxu0 0
    %744 = vmatpush.bf16.msra.mxu0 0
    %745 = vmatpush.bf16.msra.mxu0 0
    %746 = vmatpush.bf16.msra.mxu0 %v734
    %747 = vmatpush.bf16.msra.mxu0 %v733
    %748 = vmatmul.bf16.gmra.mxu0 %v738
    %v749 = vpop.f32.mrf.mxu0
    %v750 = vadd.f32 %v723, %v749
    %v751 = vpop.f32.mrf.mxu0
    %v752 = vadd.f32 %v723, %v751
    %753 = vdwg.mxu0
    %v754 = vmax.f32 %v750, 0.0
    %v755 = vmax.f32 %v752, 0.0
    %v756 = vpack.c.bf16 %v755, %v754
    %v757 = vld [vmem:[%s10] sm:$0xf]
    %v758 = vld [vmem:[%s10 + $0x4] sm:$0xf]
    %v759 = vld [vmem:[%s10 + $0x8] sm:$0xf]
    %v760 = vld [vmem:[%s10 + $0xc] sm:$0xf]
    %v761 = vld [vmem:[%s10 + $0x10] sm:$0xf]
    %v762 = vld [vmem:[%s10 + $0x14] sm:$0xf]
    %v763 = vld [vmem:[%s10 + $0x18] sm:$0xf]
    %v764 = vld [vmem:[%s10 + $0x1c] sm:$0xf]
    %v765 = vld [vmem:[%s10 + $0x20] sm:$0xf]
    %v766 = vld [vmem:[%s10 + $0x24] sm:$0xf]
    %v767 = vld [vmem:[%s10 + $0x28] sm:$0xf]
    %v768 = vld [vmem:[%s10 + $0x2c] sm:$0xf]
    %v769 = vld [vmem:[%s10 + $0x30] sm:$0xf]
    %v770 = vld [vmem:[%s10 + $0x34] sm:$0xf]
    %v771 = vld [vmem:[%s10 + $0x38] sm:$0xf]
    %v772 = vld [vmem:[%s10 + $0x3c] sm:$0xf]
    %v773 = vld [vmem:[%s11] sm:$0x1]
    %v775 = vperm.slane %v773, 0
    %v793 = vunpack.c.l.b16 %v757
    %v794 = vunpack.c.l.b16 %v758
    %v795 = vunpack.c.l.b16 %v759
    %v796 = vunpack.c.l.b16 %v760
    %v797 = vunpack.c.l.b16 %v761
    %v798 = vunpack.c.l.b16 %v762
    %v799 = vunpack.c.l.b16 %v763
    %v800 = vunpack.c.l.b16 %v764
    %v801 = vunpack.c.l.b16 %v765
    %v802 = vunpack.c.l.b16 %v766
    %v803 = vunpack.c.l.b16 %v767
    %v804 = vunpack.c.l.b16 %v768
    %v805 = vunpack.c.l.b16 %v769
    %v806 = vunpack.c.l.b16 %v770
    %v807 = vunpack.c.l.b16 %v771
    %v808 = vunpack.c.l.b16 %v772
    %v809 = vpack.c.b16 %v794, %v793
    %v810 = vpack.c.b16 %v796, %v795
    %v811 = vpack.c.b16 %v798, %v797
    %v812 = vpack.c.b16 %v800, %v799
    %v813 = vpack.c.b16 %v802, %v801
    %v814 = vpack.c.b16 %v804, %v803
    %v815 = vpack.c.b16 %v806, %v805
    %v816 = vpack.c.b16 %v808, %v807
    %825 = vmatpush.bf16.msra.mxu0 %v816
    %826 = vmatpush.bf16.msra.mxu0 %v815
    %827 = vmatpush.bf16.msra.mxu0 %v814
    %828 = vmatpush.bf16.msra.mxu0 %v813
    %829 = vmatpush.bf16.msra.mxu0 %v812
    %830 = vmatpush.bf16.msra.mxu0 %v811
    %831 = vmatpush.bf16.msra.mxu0 %v810
    %832 = vmatpush.bf16.msra.mxu0 %v809
    %833 = vmatmul.bf16.gmra.mxu0 %v756
    %v834 = vpop.f32.mrf.mxu0
    %v835 = vadd.f32 %v775, %v834
    %v836 = vpop.f32.mrf.mxu0
    %v837 = vadd.f32 %v775, %v836
    %838 = vdwg.mxu0
    %v839 = vadd.f32 %v714, %v835
    %v840 = vadd.f32 %v715, %v837
    %v841 = vsel %vm72, %v839, 0.0
    %842 = vadd.xlane.f32.xlu0 %v841
    %v843 = vpop.xlane.xlu0 %842
    %v844 = vsel %vm72, %v840, 0.0
    %845 = vadd.xlane.f32.xlu0 %v844
    %v846 = vpop.xlane.xlu0 %845
    %v847 = vmul.f32 %v843, %v665
    %v848 = vmul.f32 %v846, %v665
    %v849 = vsub.f32 %v839, %v847
    %v850 = vsub.f32 %v840, %v848
    %v851 = vmul.f32 %v849, %v849
    %v852 = vmul.f32 %v850, %v850
    %v853 = vsel %vm72, %v851, 0.0
    %854 = vadd.xlane.f32.xlu0 %v853
    %v855 = vpop.xlane.xlu0 %854
    %v856 = vsel %vm72, %v852, 0.0
    %857 = vadd.xlane.f32.xlu0 %v856
    %v858 = vpop.xlane.xlu0 %857
    %v859 = vmul.f32 %v855, %v665
    %v860 = vmul.f32 %v858, %v665
    %v861 = vadd.f32 %v859, 1e-05
    %v862 = vadd.f32 %v860, 1e-05
    %v863 = vrsqrt.pop %v861
    %v864 = vmul.f32 %v863, %v861
    %v865 = vmul.f32 %v864, %v863
    %v866 = vmul.f32 0.5, %v865
    %v867 = vsub.f32 1.5, %v866
    %v868 = vmul.f32 %v863, %v867
    %vm869 = vweird.f32 %v861
    %vm870 = vweird.f32 %v863
    %vm871 = vmor %vm869, %vm870
    %v872 = vsel %vm871, %v863, %v868
    %v873 = vrsqrt.pop %v862
    %v874 = vmul.f32 %v873, %v862
    %v875 = vmul.f32 %v874, %v873
    %v876 = vmul.f32 0.5, %v875
    %v877 = vsub.f32 1.5, %v876
    %v878 = vmul.f32 %v873, %v877
    %vm879 = vweird.f32 %v862
    %vm880 = vweird.f32 %v873
    %vm881 = vmor %vm879, %vm880
    %v882 = vsel %vm881, %v873, %v878
    %v883 = vmul.f32 %v849, %v872
    %v884 = vmul.f32 %v850, %v882
    %v885 = vld [vmem:[%s12] sm:$0x1]
    %v887 = vperm.slane %v885, 0
    %v889 = vmul.f32 %v883, %v887
    %v890 = vmul.f32 %v884, %v887
    %v891 = vld [vmem:[%s13] sm:$0x1]
    %v893 = vperm.slane %v891, 0
    %v895 = vadd.f32 %v889, %v893
    %v896 = vadd.f32 %v890, %v893
    %897 = vst.msk [vmem:[#allocation2] sm:$0xff] %vm72, %v895
    %898 = vst.msk [vmem:[#allocation2 + $0x8] sm:$0xff] %vm72, %v896
    // Predicated region
    $region58: #{tpu_custom_call.1} parent=1 // pred_check
      _
    $region59: #{tpu_custom_call.1} parent=1 // pred_check_branch
      %900 = sbr.rel (0) target = $region61
    $region60: #{tpu_custom_call.1} parent=1 // pred_region
      %902 = vsyncadd [#allocation3], 0
      %s903 = sshll.u32 [#allocation2], 4
      %s904 = int_to_ptr.vmem [resolvable:$true] %s903
      %s905 = sshll.u32 %s14, 4
      %s906 = int_to_ptr.hbm [resolvable:$true] %s905
      %911 = dma.vmem_to_hbm [thread:$0]  %s904, 256, %s906, [#allocation3], 128, 128, 8
    $region61: #{tpu_custom_call.1} parent=1 // pred_fallthru
      _
    // Predicated region
    $region62: #{tpu_custom_call.1} parent=1 // pred_check
      _
    $region63: #{tpu_custom_call.1} parent=1 // pred_check_branch
      %913 = sbr.rel (0) target = $region65
    $region64: #{tpu_custom_call.1} parent=1 // pred_region
      %915 = dma.done [#allocation3], 256
    $region65: #{tpu_custom_call.1} parent=1 // pred_fallthru
      _
    %916 = vsyncpa [#allocation3], 1

</llo_original>
